<compile_context>
chip_gen: v5e
topology: v5e:2x2
jax: 0.10.0
libtpu: 0.0.40
codegen_flags: <defaults>
</compile_context>

<pallas_src>
import jax
import jax.numpy as jnp
from jax.experimental import pallas as pl
from jax.experimental.pallas import tpu as pltpu


def layer_attention_kernel(x_ref, w1_ref, bw_ref, out_ref, s_scr):
    """One grid step: `bb` independent (M, F) attention problems.

    x_ref  : (bb*M, F)  input rows, problem-major (row index = b*M + m).
    w1_ref : (F, H)     first Linear weight, f32.
    bw_ref : (2, H)     row 0 = b1, row 1 = w2 (as a row vector), f32.
    out_ref: (bb, F+M)  f32 packed output: [:, :F] = context, [:, F:] = probs.
    s_scr  : (bb*M, 1)  f32 VMEM scratch holding the flat logits.
    """
    bbM, F = x_ref.shape
    bb = out_ref.shape[0]
    M = bbM // bb

    w1 = w1_ref[...]                      # (F, H)
    b1 = bw_ref[0:1, :]                   # (1, H)
    w2 = bw_ref[1:2, :]                   # (1, H)

    # ---- Attention MLP: ONE fused MXU matmul + one tanh pass over all rows.
    x2d = x_ref[...].astype(jnp.float32)                               # (bb*M, F)
    h = jnp.tanh(jnp.dot(x2d, w1, preferred_element_type=jnp.float32) + b1)
    # Linear(H, 1) as VPU multiply + lane reduce.  b2 is omitted: softmax over
    # the M axis is shift-invariant, so it has no effect on either output.
    s_scr[...] = jnp.sum(h * w2, axis=1, keepdims=True)                # (bb*M, 1)

    # ---- Per-problem logits, lane-dense: column m = rows m, m+M, m+2M, ...
    cols = [s_scr[pl.ds(m, bb, stride=M), :] for m in range(M)]        # M x (bb, 1)
    logits = jnp.concatenate(cols, axis=1)                             # (bb, M)

    # ---- Numerically-stable softmax along the lane (M) axis (XLU reduces).
    s_max = jnp.max(logits, axis=1, keepdims=True)                     # (bb, 1)
    e = jnp.exp(logits - s_max)                                        # (bb, M)
    denom = jnp.sum(e, axis=1, keepdims=True)                          # (bb, 1)
    # Exact reciprocal keeps the 1e-5 agreement with the reference softmax.
    probs = e * pl.reciprocal(denom, approx=False)                     # (bb, M)

    # ---- Context: ctx[b, :] = sum_m probs[b, m] * x[b, m, :].
    # x is re-read from the VMEM block via strided sublane loads, so no list
    # of live f32 row copies is held across the softmax (no spills at big bb).
    ctx = probs[:, 0:1] * x_ref[pl.ds(0, bb, stride=M), :].astype(jnp.float32)
    for m in range(1, M):
        ctx = ctx + (probs[:, m:m + 1]
                     * x_ref[pl.ds(m, bb, stride=M), :].astype(jnp.float32))

    # ---- Packed lane-dense output slab: [ ctx | probs ].
    # TODO(synk): nn.Dropout on the context vector is identity here
    # (inference / eval-mode semantics); a training path would apply a mask.
    out_ref[:, 0:F] = ctx
    out_ref[:, F:F + M] = probs


def _pick_bb(B, block_b):
    """Problems per grid step: sublane-aligned, >= 2 grid steps when possible."""
    if B <= 8:
        return B                              # single block: block dims == full dims
    bb = min(block_b, B)
    half = (((B + 1) // 2) + 7) // 8 * 8      # ceil(B/2) rounded to sublane tile
    bb = min(bb, half)                        # keep nb >= 2 (v7x dual-TC sharding)
    return max(8, (bb // 8) * 8)              # multiple of 8 whenever bb < B


def layer_attention(x, w1, b1, w2, b2=None, *, block_b=512):
    """Batched LayerAttention forward.

    x : (B, M, F) stack of independent problems, or a single (M, F) input.
        M is the PyTorch module's `batch_size` axis (the softmax axis).
    w1: (F, H), b1: (H,), w2: (H, 1).
    b2: accepted for API parity but ignored (softmax shift-invariance).

    Returns (context, scores): (B, F) in x.dtype and (B, M, 1) in f32
    (or (F,), (M, 1) for a single (M, F) input).
    """
    squeeze = x.ndim == 2
    if squeeze:
        x = x[None]
    B, M, F = x.shape
    H = w1.shape[1]

    # 2-D problem-major slab: row b*M + m corresponds to problem b, row m.
    x2d = x.reshape(B * M, F)
    w1f = jnp.asarray(w1, jnp.float32)                                 # (F, H)
    bw = jnp.concatenate([jnp.reshape(b1, (1, H)),
                          jnp.reshape(w2, (1, H))], axis=0).astype(jnp.float32)

    bb = _pick_bb(B, block_b)
    nb = pl.cdiv(B, bb)          # boundary block (if any) is clipped by Pallas

    # VMEM budget: double-buffered x/out blocks + params + live f32
    # intermediates + lane-padded logits scratch (sized for v7x's 64 MiB).
    itemsize = jnp.dtype(x.dtype).itemsize
    blk_bytes = (2 * bb * M * F * itemsize        # x block, double-buffered
                 + 2 * bb * (F + M) * 4           # out block, double-buffered
                 + (F * H + 2 * H) * 4            # params
                 + bb * M * (F + H) * 4           # x2d cast + h intermediates
                 + bb * M * 128 * 4)              # (bb*M, 1) scratch, lane-padded
    vmem_limit = int(min(max(2 * blk_bytes + (8 << 20), 32 << 20), 48 << 20))

    out = pl.pallas_call(
        layer_attention_kernel,
        grid=(nb,),
        in_specs=[
            pl.BlockSpec((bb * M, F), lambda i: (i, 0)),   # contiguous row block
            pl.BlockSpec((F, H), lambda i: (0, 0)),        # w1 (resident)
            pl.BlockSpec((2, H), lambda i: (0, 0)),        # [b1; w2] (resident)
        ],
        out_specs=pl.BlockSpec((bb, F + M), lambda i: (i, 0)),
        out_shape=jax.ShapeDtypeStruct((B, F + M), jnp.float32),
        scratch_shapes=[pltpu.VMEM((bb * M, 1), jnp.float32)],
        compiler_params=pltpu.CompilerParams(
            dimension_semantics=("parallel",),    # shard grid across v7x's 2 TCs
            vmem_limit_bytes=vmem_limit),
    )(x2d, w1f, bw)

    ctx = out[:, :F].astype(x.dtype)              # (B, F), matches input dtype
    scores = out[:, F:].reshape(B, M, 1)          # (B, M, 1), kept f32
    if squeeze:
        return ctx[0], scores[0]
    return ctx, scores


def reference(x, w1, b1, w2, b2):
    h = jnp.tanh(x @ w1 + b1)
    s = h @ w2 + b2
    p = jax.nn.softmax(s, axis=-2)                # softmax over the M axis
    ctx = jnp.sum(p * x, axis=-2)
    return ctx, p


if __name__ == "__main__":
    B = 16          # independent attention problems (added batch axis)
    M = 4           # rows per problem (PyTorch "batch_size"; softmax axis)
    F = 32          # feature_dim
    H = 16          # hidden_dim

    key = jax.random.PRNGKey(0)
    kx, kw1, kb1, kw2, kb2 = jax.random.split(key, 5)
    x = jax.random.normal(kx, (B, M, F), jnp.float32)
    w1 = jax.random.normal(kw1, (F, H), jnp.float32) * 0.1
    b1 = jax.random.normal(kb1, (H,), jnp.float32) * 0.1
    w2 = jax.random.normal(kw2, (H, 1), jnp.float32) * 0.1
    b2 = jax.random.normal(kb2, (1,), jnp.float32) * 0.1

    # Batched path: one pallas_call, grid=(2,), parallel over TensorCores.
    ctx, scores = layer_attention(x, w1, b1, w2, b2)
    jax.block_until_ready((ctx, scores))

    ctx_ref, scores_ref = reference(x, w1, b1, w2, b2)
    assert ctx.shape == (B, F) and scores.shape == (B, M, 1)
    assert jnp.allclose(ctx, ctx_ref, atol=1e-5, rtol=1e-5)
    assert jnp.allclose(scores, scores_ref, atol=1e-5, rtol=1e-5)

    # Unbatched path (the original PyTorch forward signature: x is (M, F)).
    ctx1, scores1 = layer_attention(x[0], w1, b1, w2, b2)
    jax.block_until_ready((ctx1, scores1))
    assert ctx1.shape == (F,) and scores1.shape == (M, 1)
    assert jnp.allclose(ctx1, ctx_ref[0], atol=1e-5, rtol=1e-5)
    assert jnp.allclose(scores1, scores_ref[0], atol=1e-5, rtol=1e-5)

    print("KERNEL_OK")
</pallas_src>

<mosaic_0001>
module attributes {stable_mosaic.version = 11 : i64} {
  func.func @layer_attention_kernel(%arg0: i32, %arg1: memref<32x32xf32, #tpu.memory_space<vmem>>, %arg2: memref<32x16xf32, #tpu.memory_space<vmem>>, %arg3: memref<2x16xf32, #tpu.memory_space<vmem>>, %arg4: memref<8x36xf32, #tpu.memory_space<vmem>>, %arg5: memref<32x1xf32, #tpu.memory_space<vmem>>) attributes {dimension_semantics = [#tpu.dimension_semantics<parallel>], iteration_bounds = array<i64: 2>, scalar_prefetch = 0 : i64, scratch_operands = 1 : i64, tpu.core_type = #tpu.core_type<tc>, window_params = [{transform_indices = @transform_0, window_bounds = array<i64: 32, 32>}, {pipeline_mode = #tpu.pipeline_mode<synchronous>, transform_indices = @transform_1, window_bounds = array<i64: 32, 16>}, {pipeline_mode = #tpu.pipeline_mode<synchronous>, transform_indices = @transform_2, window_bounds = array<i64: 2, 16>}, {transform_indices = @transform_3, window_bounds = array<i64: 8, 36>}]} {
    %c0 = arith.constant 0 : index
    %c0_0 = arith.constant 0 : index
    %0 = vector.load %arg2[%c0, %c0_0] : memref<32x16xf32, #tpu.memory_space<vmem>>, vector<32x16xf32>
    %c0_1 = arith.constant 0 : index
    %c0_2 = arith.constant 0 : index
    %1 = vector.load %arg3[%c0_1, %c0_2] : memref<2x16xf32, #tpu.memory_space<vmem>>, vector<1x16xf32>
    %c1 = arith.constant 1 : index
    %c0_3 = arith.constant 0 : index
    %2 = vector.load %arg3[%c1, %c0_3] : memref<2x16xf32, #tpu.memory_space<vmem>>, vector<1x16xf32>
    %c0_4 = arith.constant 0 : index
    %c0_5 = arith.constant 0 : index
    %3 = vector.load %arg1[%c0_4, %c0_5] : memref<32x32xf32, #tpu.memory_space<vmem>>, vector<32x32xf32>
    %cst = arith.constant dense<0.000000e+00> : vector<32x16xf32>
    %4 = tpu.matmul %3, %0, %cst {dimension_numbers = #tpu.dot_dimension_numbers<[1], [0], [0], [1], [0, 0, 1, 1], [], []>} : vector<32x32xf32>, vector<32x16xf32>, vector<32x16xf32> -> vector<32x16xf32>
    %5 = vector.broadcast %1 : vector<1x16xf32> to vector<32x16xf32>
    %6 = arith.addf %4, %5 : vector<32x16xf32>
    %7 = math.tanh %6 : vector<32x16xf32>
    %8 = vector.broadcast %2 : vector<1x16xf32> to vector<32x16xf32>
    %9 = arith.mulf %7, %8 : vector<32x16xf32>
    %cst_6 = arith.constant dense<0.000000e+00> : vector<32xf32>
    %10 = vector.multi_reduction <add>, %9, %cst_6 [1] : vector<32x16xf32> to vector<32xf32>
    %11 = vector.shape_cast %10 : vector<32xf32> to vector<32x1xf32>
    %c0_7 = arith.constant 0 : index
    %c0_8 = arith.constant 0 : index
    %12 = vector.load %arg5[%c0_7, %c0_8] : memref<32x1xf32, #tpu.memory_space<vmem>>, vector<32x1xf32>
    tpu.vector_store %arg5[%c0_7, %c0_8], %11 {strides = array<i32>} : memref<32x1xf32, #tpu.memory_space<vmem>>, vector<32x1xf32>,
    %c0_9 = arith.constant 0 : index
    %c0_10 = arith.constant 0 : index
    %13 = tpu.strided_load %arg5[%c0_9, %c0_10] {strides = array<i32: 4, 1>} : memref<32x1xf32, #tpu.memory_space<vmem>>, vector<8x1xf32>
    %c1_11 = arith.constant 1 : index
    %c0_12 = arith.constant 0 : index
    %14 = tpu.strided_load %arg5[%c1_11, %c0_12] {strides = array<i32: 4, 1>} : memref<32x1xf32, #tpu.memory_space<vmem>>, vector<8x1xf32>
    %c2 = arith.constant 2 : index
    %c0_13 = arith.constant 0 : index
    %15 = tpu.strided_load %arg5[%c2, %c0_13] {strides = array<i32: 4, 1>} : memref<32x1xf32, #tpu.memory_space<vmem>>, vector<8x1xf32>
    %c3 = arith.constant 3 : index
    %c0_14 = arith.constant 0 : index
    %16 = tpu.strided_load %arg5[%c3, %c0_14] {strides = array<i32: 4, 1>} : memref<32x1xf32, #tpu.memory_space<vmem>>, vector<8x1xf32>
    %17 = tpu.concatenate %13, %14, %15, %16 in 1 : vector<8x1xf32>, vector<8x1xf32>, vector<8x1xf32>, vector<8x1xf32> -> vector<8x4xf32>
    %cst_15 = arith.constant dense<0xFF800000> : vector<8xf32>
    %18 = vector.multi_reduction <maximumf>, %17, %cst_15 [1] : vector<8x4xf32> to vector<8xf32>
    %19 = vector.shape_cast %18 : vector<8xf32> to vector<8x1xf32>
    %20 = vector.broadcast %19 : vector<8x1xf32> to vector<8x4xf32>
    %21 = arith.subf %17, %20 : vector<8x4xf32>
    %22 = math.exp %21 : vector<8x4xf32>
    %cst_16 = arith.constant dense<0.000000e+00> : vector<8xf32>
    %23 = vector.multi_reduction <add>, %22, %cst_16 [1] : vector<8x4xf32> to vector<8xf32>
    %24 = vector.shape_cast %23 : vector<8xf32> to vector<8x1xf32>
    %25 = tpu.reciprocal %24 : vector<8x1xf32> -> vector<8x1xf32>
    %26 = vector.broadcast %25 : vector<8x1xf32> to vector<8x4xf32>
    %27 = arith.mulf %22, %26 : vector<8x4xf32>
    %28 = vector.extract_strided_slice %27 {offsets = [0, 0], sizes = [8, 1], strides = [1, 1]} : vector<8x4xf32> to vector<8x1xf32>
    %c0_17 = arith.constant 0 : index
    %c0_18 = arith.constant 0 : index
    %29 = tpu.strided_load %arg1[%c0_17, %c0_18] {strides = array<i32: 4, 1>} : memref<32x32xf32, #tpu.memory_space<vmem>>, vector<8x32xf32>
    %30 = vector.broadcast %28 : vector<8x1xf32> to vector<8x32xf32>
    %31 = arith.mulf %30, %29 : vector<8x32xf32>
    %32 = vector.extract_strided_slice %27 {offsets = [0, 1], sizes = [8, 1], strides = [1, 1]} : vector<8x4xf32> to vector<8x1xf32>
    %c1_19 = arith.constant 1 : index
    %c0_20 = arith.constant 0 : index
    %33 = tpu.strided_load %arg1[%c1_19, %c0_20] {strides = array<i32: 4, 1>} : memref<32x32xf32, #tpu.memory_space<vmem>>, vector<8x32xf32>
    %34 = vector.broadcast %32 : vector<8x1xf32> to vector<8x32xf32>
    %35 = arith.mulf %34, %33 : vector<8x32xf32>
    %36 = arith.addf %31, %35 : vector<8x32xf32>
    %37 = vector.extract_strided_slice %27 {offsets = [0, 2], sizes = [8, 1], strides = [1, 1]} : vector<8x4xf32> to vector<8x1xf32>
    %c2_21 = arith.constant 2 : index
    %c0_22 = arith.constant 0 : index
    %38 = tpu.strided_load %arg1[%c2_21, %c0_22] {strides = array<i32: 4, 1>} : memref<32x32xf32, #tpu.memory_space<vmem>>, vector<8x32xf32>
    %39 = vector.broadcast %37 : vector<8x1xf32> to vector<8x32xf32>
    %40 = arith.mulf %39, %38 : vector<8x32xf32>
    %41 = arith.addf %36, %40 : vector<8x32xf32>
    %42 = vector.extract_strided_slice %27 {offsets = [0, 3], sizes = [8, 1], strides = [1, 1]} : vector<8x4xf32> to vector<8x1xf32>
    %c3_23 = arith.constant 3 : index
    %c0_24 = arith.constant 0 : index
    %43 = tpu.strided_load %arg1[%c3_23, %c0_24] {strides = array<i32: 4, 1>} : memref<32x32xf32, #tpu.memory_space<vmem>>, vector<8x32xf32>
    %44 = vector.broadcast %42 : vector<8x1xf32> to vector<8x32xf32>
    %45 = arith.mulf %44, %43 : vector<8x32xf32>
    %46 = arith.addf %41, %45 : vector<8x32xf32>
    %c0_25 = arith.constant 0 : index
    %c0_26 = arith.constant 0 : index
    %47 = vector.load %arg4[%c0_25, %c0_26] : memref<8x36xf32, #tpu.memory_space<vmem>>, vector<8x32xf32>
    tpu.vector_store %arg4[%c0_25, %c0_26], %46 {strides = array<i32>} : memref<8x36xf32, #tpu.memory_space<vmem>>, vector<8x32xf32>,
    %c0_27 = arith.constant 0 : index
    %c32 = arith.constant 32 : index
    %48 = vector.load %arg4[%c0_27, %c32] : memref<8x36xf32, #tpu.memory_space<vmem>>, vector<8x4xf32>
    tpu.vector_store %arg4[%c0_27, %c32], %27 {strides = array<i32>} : memref<8x36xf32, #tpu.memory_space<vmem>>, vector<8x4xf32>,
    return
  }
  func.func @transform_0(%arg0: i32) -> (i32, i32) {
    %c0_i32 = arith.constant 0 : i32
    %c0_i32_0 = arith.constant 0 : i32
    return %arg0, %c0_i32 : i32, i32
  }
  func.func @transform_1(%arg0: i32) -> (i32, i32) {
    %c0_i32 = arith.constant 0 : i32
    %c0_i32_0 = arith.constant 0 : i32
    %c0_i32_1 = arith.constant 0 : i32
    return %c0_i32, %c0_i32_0 : i32, i32
  }
  func.func @transform_2(%arg0: i32) -> (i32, i32) {
    %c0_i32 = arith.constant 0 : i32
    %c0_i32_0 = arith.constant 0 : i32
    %c0_i32_1 = arith.constant 0 : i32
    return %c0_i32, %c0_i32_0 : i32, i32
  }
  func.func @transform_3(%arg0: i32) -> (i32, i32) {
    %c0_i32 = arith.constant 0 : i32
    %c0_i32_0 = arith.constant 0 : i32
    return %arg0, %c0_i32 : i32, i32
  }
}

</mosaic_0001>

<llo_original>
// kernel: tpu_custom_call.1
$region0: #{tpu_custom_call.1}
  #allocation0 [shape = 'u32[]', space=smem, size = 0x4, offset = 0x4, fixed_abs, tag = 'smem constant byte address 0x4 - core index']
  #allocation1 [shape = 'u32[72,128]{1,0:T(1,128)}', space=vmem, size = 0x9000, scoped, tag = 'internal scratch']
  #allocation2 [shape = 'f32[32,1]{1,0:T(8,128)}', space=vmem, size = 0x4000, scoped, tag = 'scratch operand']
  %s0 = inlined_call_operand.vmem [shape: f32[64,32], index: 0, kind: input, shape index: {}]
  %s1 = inlined_call_operand.vmem [shape: f32[32,16], index: 1, kind: input, shape index: {}]
  %s2 = inlined_call_operand.vmem [shape: f32[2,16], index: 2, kind: input, shape index: {}]
  %s3 = inlined_call_operand.hbm [shape: f32[16,36], index: 3, kind: output, shape index: {}]
  %s4 = sld [smem:[#allocation0]]
  $region45: #{tpu_custom_call.1} parent=0
    _
  %s6 = ssub.s32 1, %s4
  %s7 = scalar_select 0, %s6, %s4
  $region1: #{tpu_custom_call.1} parent=0
    #allocation3 [shape = 'u8[8192]{0}', space=vmem, size = 0x2000, scoped, tag = 'output window, operand 0']
    #allocation4 [shape = 's32[2]{0}', space=sflag, size = 0x8, scoped, tag = 'scoped memory for tpu_custom_call.1']
    %8 = vsyncpa [#allocation4], 0
    %s9 = scalar_lea.sflag [#allocation4], 1
    %10 = vsyncpa %s9, 0
    loop: start=0, step=1, limit=4
    $region2: #{tpu_custom_call.1} parent=1 // loop_pre_header
      _
    $region3: #{tpu_custom_call.1} parent=1 // loop_header
      %s12 = sphi 0, %s16
      %p13 = scmp.ge.s32.totalorder %s12, 4
      %s22 = sphi 0, %s24
      %s25 = sphi 0, %s22
      %s26 = sphi 0, %s25
      %s42 = sphi 0, %s26
      %s46 = sphi 0, %s46
      %s48 = sphi 0, %s46
      %s49 = sphi 0, %s48
      %s63 = sphi 0, %s49
      %s67 = sphi 0, %s67
      %s69 = sphi 0, %s67
      %s70 = sphi 0, %s69
      %s84 = sphi 0, %s70
      %s90 = sphi 0, %s92
      %s93 = sphi 0, %s90
      %s94 = sphi 0, %s93
      %s110 = sphi 0, %s94
    $region4: #{tpu_custom_call.1} parent=1 // loop_header_branch
      %15 = sbr.rel (%p13) target = $region8
    $region5: #{tpu_custom_call.1} parent=1 // loop_body
      %s17 = ssub.s32 %s12, 1
      %s18 = ssub.s32 %s12, 2
      %s19 = sadd.s32 %s12, 1
      %s20 = ssub.s32 %s12, %s19
      %p21 = scmp.eq.s32.totalorder %s20, 0
      %s23 = sadd.s32 %s22, 1
      %s24 = scalar_select %p21, %s22, %s23
      %p27 = pneg %p21
      %p28 = scmp.eq.s32.totalorder %s12, 1
      %p29 = por %p27, %p28
      %p30 = scmp.ne.s32.totalorder %s22, %s25
      %p31 = scmp.eq.s32.totalorder %s12, 0
      %p32 = por %p30, %p31
      %p33 = scmp.ne.s32.totalorder %s22, %s25
      %p34 = scmp.eq.s32.totalorder %s17, 1
      %p35 = por %p33, %p34
      %p36 = scmp.ne.s32.totalorder %s25, %s26
      %p37 = scmp.eq.s32.totalorder %s17, 0
      %p38 = por %p36, %p37
      %p39 = scmp.ne.s32.totalorder %s25, %s26
      %p40 = scmp.eq.s32.totalorder %s18, 1
      %p41 = por %p39, %p40
      %p43 = scmp.ne.s32.totalorder %s26, %s42
      %p44 = scmp.eq.s32.totalorder %s18, 0
      %p45 = por %p43, %p44
      %s47 = sadd.s32 %s46, 1
      %p50 = scmp.eq.s32.totalorder %s12, 1
      %p51 = scmp.ne.s32.totalorder %s46, %s48
      %p52 = scmp.eq.s32.totalorder %s12, 0
      %p53 = por %p51, %p52
      %p54 = scmp.ne.s32.totalorder %s46, %s48
      %p55 = scmp.eq.s32.totalorder %s17, 1
      %p56 = por %p54, %p55
      %p57 = scmp.ne.s32.totalorder %s48, %s49
      %p58 = scmp.eq.s32.totalorder %s17, 0
      %p59 = por %p57, %p58
      %p60 = scmp.ne.s32.totalorder %s48, %s49
      %p61 = scmp.eq.s32.totalorder %s18, 1
      %p62 = por %p60, %p61
      %p64 = scmp.ne.s32.totalorder %s49, %s63
      %p65 = scmp.eq.s32.totalorder %s18, 0
      %p66 = por %p64, %p65
      %s68 = sadd.s32 %s67, 1
      %p71 = scmp.eq.s32.totalorder %s12, 1
      %p72 = scmp.ne.s32.totalorder %s67, %s69
      %p73 = scmp.eq.s32.totalorder %s12, 0
      %p74 = por %p72, %p73
      %p75 = scmp.ne.s32.totalorder %s67, %s69
      %p76 = scmp.eq.s32.totalorder %s17, 1
      %p77 = por %p75, %p76
      %p78 = scmp.ne.s32.totalorder %s69, %s70
      %p79 = scmp.eq.s32.totalorder %s17, 0
      %p80 = por %p78, %p79
      %p81 = scmp.ne.s32.totalorder %s69, %s70
      %p82 = scmp.eq.s32.totalorder %s18, 1
      %p83 = por %p81, %p82
      %p85 = scmp.ne.s32.totalorder %s70, %s84
      %p86 = scmp.eq.s32.totalorder %s18, 0
      %p87 = por %p85, %p86
      %s88 = ssub.s32 %s12, %s19
      %p89 = scmp.eq.s32.totalorder %s88, 0
      %s91 = sadd.s32 %s90, 1
      %s92 = scalar_select %p89, %s90, %s91
      %p95 = pneg %p89
      %p96 = scmp.eq.s32.totalorder %s12, 1
      %p97 = por %p95, %p96
      %p98 = scmp.ne.s32.totalorder %s90, %s93
      %p99 = scmp.eq.s32.totalorder %s12, 0
      %p100 = por %p98, %p99
      %p101 = scmp.ne.s32.totalorder %s90, %s93
      %p102 = scmp.eq.s32.totalorder %s17, 1
      %p103 = por %p101, %p102
      %p104 = scmp.ne.s32.totalorder %s93, %s94
      %p105 = scmp.eq.s32.totalorder %s17, 0
      %p106 = por %p104, %p105
      %p107 = scmp.ne.s32.totalorder %s93, %s94
      %p108 = scmp.eq.s32.totalorder %s18, 1
      %p109 = por %p107, %p108
      %p111 = scmp.ne.s32.totalorder %s94, %s110
      %p112 = scmp.eq.s32.totalorder %s18, 0
      %p113 = por %p111, %p112
      %p114 = scmp.le.s32.totalorder 1, %s12
      %p115 = scmp.lt.s32.totalorder %s12, 3
      %p116 = pnand %p114, %p115
      %p117 = pneg %p116
      // Predicated region
      $region9: #{tpu_custom_call.1} parent=5 // pred_check
        _
      $region10: #{tpu_custom_call.1} parent=5 // pred_check_branch
        %119 = sbr.rel (%p116) target = $region12
      $region11: #{tpu_custom_call.1} parent=5 // pred_region
        %s120 = ssub.s32 %s12, 1
        // Predicated region
        $region13: #{tpu_custom_call.1} parent=11 // pred_check
          %p121 = pneg %p59
        $region14: #{tpu_custom_call.1} parent=11 // pred_check_branch
          %123 = sbr.rel (%p121) target = $region16
        $region15: #{tpu_custom_call.1} parent=11 // pred_region
          _
        $region16: #{tpu_custom_call.1} parent=11 // pred_fallthru
          _
        // Predicated region
        $region17: #{tpu_custom_call.1} parent=11 // pred_check
          %p124 = pneg %p80
        $region18: #{tpu_custom_call.1} parent=11 // pred_check_branch
          %126 = sbr.rel (%p124) target = $region20
        $region19: #{tpu_custom_call.1} parent=11 // pred_region
          _
        $region20: #{tpu_custom_call.1} parent=11 // pred_fallthru
          _
      $region12: #{tpu_custom_call.1} parent=5 // pred_fallthru
        _
      %p127 = scmp.lt.s32.totalorder %s12, 2
      // Predicated region
      $region21: #{tpu_custom_call.1} parent=5 // pred_check
        %p128 = pneg %p127
      $region22: #{tpu_custom_call.1} parent=5 // pred_check_branch
        %130 = sbr.rel (%p128) target = $region24
      $region23: #{tpu_custom_call.1} parent=5 // pred_region
        // Predicated region
        $region25: #{tpu_custom_call.1} parent=23 // pred_check
          %p131 = pneg %p32
        $region26: #{tpu_custom_call.1} parent=23 // pred_check_branch
          %133 = sbr.rel (%p131) target = $region28
        $region27: #{tpu_custom_call.1} parent=23 // pred_region
          %s134 = smul.u32 4, %s12
          %p135 = scmp.lt.s32.totalorder %s134, 7
          %s136 = scalar_select %p135, %s134, 7
          %s137 = smul.addr %s136, 8
          %s138 = scalar_lea.vmem %s0, %s137
          %s139 = smul.u32 4, %s12
        $region28: #{tpu_custom_call.1} parent=23 // pred_fallthru
          _
      $region24: #{tpu_custom_call.1} parent=5 // pred_fallthru
        _
      %p140 = scmp.le.s32.totalorder 1, %s12
      %p141 = scmp.lt.s32.totalorder %s12, 3
      %p142 = pnand %p140, %p141
      %p143 = pneg %p142
      // Predicated region
      $region29: #{tpu_custom_call.1} parent=5 // pred_check
        _
      $region30: #{tpu_custom_call.1} parent=5 // pred_check_branch
        %145 = sbr.rel (%p142) target = $region32
      $region31: #{tpu_custom_call.1} parent=5 // pred_region
        %s146 = ssub.s32 %s12, 1
        %s147 = smul.u32 4, %s17
        %p148 = scmp.lt.s32.totalorder %s147, 7
        %s149 = scalar_select %p148, %s147, 7
        %s150 = smul.addr %s149, 8
        %s151 = scalar_lea.vmem %s0, %s150
        %p152 = pneg %p38
        %p153 = pneg %p35
        %p154 = pneg %p59
        %p155 = pneg %p56
        %p156 = pneg %p80
        %p157 = pneg %p77
        %p158 = pneg %p106
        %p159 = pneg %p103
        %s160 = sand.u32 %s93, 1
        %s161 = scalar_lea.sflag [#allocation4], %s160
        %s162 = sand.u32 %s93, 1
        %s163 = smul.addr %s162, 8
        %s164 = scalar_lea.vmem [#allocation3], %s163
        %s165 = smul.u32 4, %s17
        %p166 = scmp.lt.s32.totalorder %s165, 7
        %s167 = scalar_select %p166, %s165, 7
        %s168 = smul.addr %s167, 8
        %s169 = scalar_lea.vmem %s0, %s168
        %s170 = smul.u32 4, %s17
        %v171 = vld [vmem:[%s1] sm:$0xff]
        %v172 = vld [vmem:[%s1 + $0x8] sm:$0xff]
        %v173 = vld [vmem:[%s1 + $0x10] sm:$0xff]
        %v174 = vld [vmem:[%s1 + $0x18] sm:$0xff]
        %v175 = vld [vmem:[%s2] sm:$0x1]
        %v176 = vld [vmem:[%s2 + $0x1] sm:$0x1]
        %v177 = vld [vmem:[%s169] sm:$0xff]
        %v178 = vld [vmem:[%s169 + $0x8] sm:$0xff]
        %v179 = vld [vmem:[%s169 + $0x10] sm:$0xff]
        %v180 = vld [vmem:[%s169 + $0x18] sm:$0xff]
        %v181 = vperm.slane %v175, 0
        %vm182 = vcmask 261120
        %v184 = vsel %vm182, %v177, 0
        %v187 = vsel %vm182, %v178, 0
        %v190 = vsel %vm182, %v179, 0
        %v193 = vsel %vm182, %v180, 0
        %195 = vmatpush.msra.mxu0 0.0
        %196 = vmatpush.msra.mxu0 0.0
        %197 = vmatpush.msra.mxu0 0.0
        %198 = vmatpush.msra.mxu0 0.0
        %199 = vmatpush.msra.mxu0 0.0
        %200 = vmatpush.msra.mxu0 0.0
        %201 = vmatpush.msra.mxu0 0.0
        %202 = vmatpush.msra.mxu0 0.0
        %203 = vmatpush.msra.mxu0 0.0
        %204 = vmatpush.msra.mxu0 0.0
        %205 = vmatpush.msra.mxu0 0.0
        %206 = vmatpush.msra.mxu0 0.0
        %207 = vmatpush.msra.mxu0 %v174
        %208 = vmatpush.msra.mxu0 %v173
        %209 = vmatpush.msra.mxu0 %v172
        %210 = vmatpush.msra.mxu0 %v171
        %211 = vmatmul.f32.gmra.mxu0 %v184
        %v212 = vpop.f32.mrf.mxu0
        %v213 = vadd.f32 %v181, %v212
        %214 = vmatmul.f32.gmra.mxu0 %v187
        %v215 = vpop.f32.mrf.mxu0
        %v216 = vadd.f32 %v181, %v215
        %217 = vmatmul.f32.gmra.mxu0 %v190
        %v218 = vpop.f32.mrf.mxu0
        %v219 = vadd.f32 %v181, %v218
        %220 = vmatmul.f32.gmra.mxu0 %v193
        %v221 = vpop.f32.mrf.mxu0
        %v222 = vadd.f32 %v181, %v221
        %223 = vdwg.mxu0
        %v224 = vtanh.pop %v213
        %v225 = vtanh.pop %v216
        %v226 = vtanh.pop %v219
        %v227 = vtanh.pop %v222
        %v228 = vperm.slane %v176, 0
        %v229 = vmul.f32 %v224, %v228
        %v230 = vmul.f32 %v225, %v228
        %v231 = vmul.f32 %v226, %v228
        %v232 = vmul.f32 %v227, %v228
        %vm233 = vcmask 130048
        %v234 = vsel %vm233, %v229, 0.0
        %235 = vadd.xlane.f32.xlu0 %v234
        %v236 = vpop.xlane.xlu0 %235
        %v237 = vsel %vm233, %v230, 0.0
        %238 = vadd.xlane.f32.xlu0 %v237
        %v239 = vpop.xlane.xlu0 %238
        %v240 = vsel %vm233, %v231, 0.0
        %241 = vadd.xlane.f32.xlu0 %v240
        %v242 = vpop.xlane.xlu0 %241
        %v243 = vsel %vm233, %v232, 0.0
        %244 = vadd.xlane.f32.xlu0 %v243
        %v245 = vpop.xlane.xlu0 %244
        %vm246 = vcmask 7168
        %247 = vst.msk [vmem:[#allocation2] sm:$0xff] %vm246, %v236
        %248 = vst.msk [vmem:[#allocation2 + $0x8] sm:$0xff] %vm246, %v239
        %249 = vst.msk [vmem:[#allocation2 + $0x10] sm:$0xff] %vm246, %v242
        %250 = vst.msk [vmem:[#allocation2 + $0x18] sm:$0xff] %vm246, %v245
        %v251 = vld [vmem:[#allocation2] ss:$4 sm:$0xff]
        %s252 = scalar_lea.vmem [#allocation2], 1
        %v253 = vld [vmem:[%s252] ss:$4 sm:$0xff]
        %s254 = scalar_lea.vmem [#allocation2], 2
        %v255 = vld [vmem:[%s254] ss:$4 sm:$0xff]
        %s256 = scalar_lea.vmem [#allocation2], 3
        %v257 = vld [vmem:[%s256] ss:$4 sm:$0xff]
        %259 = vrot.lane.b32.xlu0 %v253, 1
        %v260 = vpop.permute.xlu0 %259
        %263 = vrot.lane.b32.xlu0 %v255, 2
        %v264 = vpop.permute.xlu0 %263
        %267 = vrot.lane.b32.xlu0 %v257, 3
        %v268 = vpop.permute.xlu0 %267
        %v270 = vsel %vm246, %v251, %v260
        %vm271 = vcmask 15360
        %v272 = vsel %vm271, %v270, %v264
        %vm273 = vcmask 23552
        %v274 = vsel %vm273, %v272, %v268
        %vm275 = vcmask 31744
        %v276 = vsel %vm275, %v274, -inf
        %277 = vmax.xlane.f32.xlu0 %v276
        %v278 = vpop.xlane.xlu0 %277
        %v279 = vsub.f32 %v274, %v278
        %v280 = vmul.f32 %v279, 1.442695
        %v281 = vpow.pop %v280
        %v282 = vsel %vm275, %v281, 0.0
        %283 = vadd.xlane.f32.xlu0 %v282
        %v284 = vpop.xlane.xlu0 %283
        %v285 = vrcp.pop %v284
        %v286 = vmul.f32 %v284, %v285
        %v287 = vsub.f32 1.0, %v286
        %v288 = vmul.f32 %v285, %v287
        %v289 = vadd.f32 %v285, %v288
        %vm290 = vweird.f32 %v284
        %vm291 = vweird.f32 %v285
        %vm292 = vmor %vm290, %vm291
        %v293 = vsel %vm292, %v285, %v289
        %v294 = vand.u32 2147483647, %v284
        %vm295 = vcmp.eq.f32.partialorder %v294, 8.507059e+37
        %v296 = vand.u32 %v284, 2147483648
        %v297 = vor.u32 1.1754944e-38, %v296
        %v298 = vsel %vm295, %v297, %v293
        %v299 = vmul.f32 %v281, %v298
        %v300 = vld [vmem:[%s169] ss:$4 sm:$0xff]
        %302 = vset.pattern.permute.xlu0 0
        %303 = vperm.xlu0 %302, %v299
        %v304 = vpop.permute.xlu0 %303
        %v306 = vmul.f32 %v304, %v300
        %s307 = scalar_lea.vmem %s169, 1
        %v308 = vld [vmem:[%s307] ss:$4 sm:$0xff]
        %309 = vset.pattern.permute.xlu0 1
        %310 = vperm.xlu0 %309, %v299
        %v311 = vpop.permute.xlu0 %310
        %v313 = vmul.f32 %v311, %v308
        %v314 = vadd.f32 %v306, %v313
        %s315 = scalar_lea.vmem %s169, 2
        %v316 = vld [vmem:[%s315] ss:$4 sm:$0xff]
        %317 = vset.pattern.permute.xlu0 2
        %318 = vperm.xlu0 %317, %v299
        %v319 = vpop.permute.xlu0 %318
        %v321 = vmul.f32 %v319, %v316
        %v322 = vadd.f32 %v314, %v321
        %s323 = scalar_lea.vmem %s169, 3
        %v324 = vld [vmem:[%s323] ss:$4 sm:$0xff]
        %325 = vset.pattern.permute.xlu0 3
        %326 = vperm.xlu0 %325, %v299
        %v327 = vpop.permute.xlu0 %326
        %v329 = vmul.f32 %v327, %v324
        %v330 = vadd.f32 %v322, %v329
        %331 = vst.msk [vmem:[%s164] sm:$0xff] %vm182, %v330
        %332 = vrot.lane.b32.xlu0 %v299, 32
        %v333 = vpop.permute.xlu0 %332
        %vm335 = vcmask 294144
        %336 = vst.msk [vmem:[%s164] sm:$0xff] %vm335, %v333
        %s337 = sand.u32 %s93, 1
        %s338 = scalar_lea.sflag [#allocation4], %s337
        %s339 = sand.u32 %s93, 1
        %s340 = smul.addr %s339, 8
        %s341 = scalar_lea.vmem [#allocation3], %s340
        // Predicated region
        $region33: #{tpu_custom_call.1} parent=31 // pred_check
          %p342 = pneg %p103
        $region34: #{tpu_custom_call.1} parent=31 // pred_check_branch
          %344 = sbr.rel (%p342) target = $region36
        $region35: #{tpu_custom_call.1} parent=31 // pred_region
          %346 = vsyncadd %s338, 0
          %s347 = smul.addr %s17, 8
          %s348 = scalar_lea.hbm %s3, %s347
          %s350 = sshll.u32 %s341, 4
          %s351 = int_to_ptr.vmem [resolvable:$true] %s350
          %s352 = sshll.u32 %s348, 4
          %s353 = int_to_ptr.hbm [resolvable:$true] %s352
          %355 = dma.vmem_to_hbm [thread:$0]  %s351, 128, %s353, %s338
        $region36: #{tpu_custom_call.1} parent=31 // pred_fallthru
          _
      $region32: #{tpu_custom_call.1} parent=5 // pred_fallthru
        _
      %p356 = scmp.le.s32.totalorder 2, %s12
      // Predicated region
      $region37: #{tpu_custom_call.1} parent=5 // pred_check
        %p357 = pneg %p356
      $region38: #{tpu_custom_call.1} parent=5 // pred_check_branch
        %359 = sbr.rel (%p357) target = $region40
      $region39: #{tpu_custom_call.1} parent=5 // pred_region
        %s360 = ssub.s32 %s12, 2
        // Predicated region
        $region41: #{tpu_custom_call.1} parent=39 // pred_check
          %p361 = pneg %p109
        $region42: #{tpu_custom_call.1} parent=39 // pred_check_branch
          %363 = sbr.rel (%p361) target = $region44
        $region43: #{tpu_custom_call.1} parent=39 // pred_region
          %s364 = sand.u32 %s94, 1
          %s365 = scalar_lea.sflag [#allocation4], %s364
          %s366 = sand.u32 %s94, 1
          %s367 = smul.addr %s366, 8
          %s368 = scalar_lea.vmem [#allocation3], %s367
          %370 = dma.done %s365, 128
        $region44: #{tpu_custom_call.1} parent=39 // pred_fallthru
          _
      $region40: #{tpu_custom_call.1} parent=5 // pred_fallthru
        _
    $region6: #{tpu_custom_call.1} parent=1 // loop_footer
      %s16 = sadd.s32 1, %s12
    $region7: #{tpu_custom_call.1} parent=1 // loop_footer_branch
      %11 = sbr.rel target = $region3
    $region8: #{tpu_custom_call.1} parent=1 // loop_exit
      _
    %371 = vsyncpa [#allocation4], 1
    %s372 = scalar_lea.sflag [#allocation4], 1
    %373 = vsyncpa %s372, 1

</llo_original>
